<compile_context>
chip_gen: v7x
topology: tpu7x:2x2x1
jax: 0.10.0
libtpu: 0.0.40
codegen_flags: <defaults>
</compile_context>

<pallas_src>
import jax
import jax.numpy as jnp
from jax.experimental import pallas as pl
from jax.experimental.pallas import tpu as pltpu


def _disc_loss_kernel(counts_ref, logits_ref, labels_ref, out_ref):
    # counts_ref: SMEM (2,)    int32 -> [n_true, n_false]
    # logits_ref: VMEM (2, P)  f32   -> row 0 = true logits, row 1 = false logits
    # labels_ref: VMEM (2, P)  f32   -> row 0 = true labels, row 1 = false labels
    # out_ref:    VMEM (2, 1)  f32   -> [[loss_true], [loss_false]]
    x = logits_ref[...]
    y = labels_ref[...]
    # Numerically stable BCE-with-logits: max(x,0) - x*y + log1p(exp(-|x|)).
    bce = jnp.maximum(x, 0.0) - x * y + jnp.log1p(jnp.exp(-jnp.abs(x)))

    n_t = counts_ref[0]
    n_f = counts_ref[1]

    # Mask out the padded tail of each row before reducing.
    col = jax.lax.broadcasted_iota(jnp.int32, bce.shape, 1)
    row = jax.lax.broadcasted_iota(jnp.int32, bce.shape, 0)
    limit = jnp.where(row == 0, n_t, n_f)
    masked = jnp.where(col < limit, bce, 0.0)

    # One lane-axis reduce -> per-sublane (2, 1) sums, then a single store.
    sums = jnp.sum(masked, axis=1, keepdims=True)                      # (2, 1)
    cnt = jnp.where(
        jax.lax.broadcasted_iota(jnp.int32, (2, 1), 0) == 0, n_t, n_f
    )
    denom = jnp.maximum(cnt, 1).astype(jnp.float32)
    # Empty-batch guard: mean over zero elements -> 0.0 (instead of NaN).
    out_ref[...] = jnp.where(cnt == 0, 0.0, sums / denom)


def _disc_loss(counts, logits2, labels2):
    p = logits2.shape[1]
    cost = pl.CostEstimate(
        flops=16 * p,             # ~8 VPU ops per element over 2*P elements
        transcendentals=4 * p,    # exp + log1p per element over 2*P elements
        bytes_accessed=16 * p + 16,
    )
    out = pl.pallas_call(
        _disc_loss_kernel,
        out_shape=jax.ShapeDtypeStruct((2, 1), jnp.float32),
        in_specs=[
            pl.BlockSpec(memory_space=pltpu.MemorySpace.SMEM),  # counts
            pl.BlockSpec((2, p), lambda: (0, 0)),               # logits (2, P)
            pl.BlockSpec((2, p), lambda: (0, 0)),               # labels (2, P)
        ],
        out_specs=pl.BlockSpec((2, 1), lambda: (0, 0)),
        cost_estimate=cost,
    )(counts, logits2, labels2)
    return out[0, 0], out[1, 0]


@jax.jit
def _disc_loss_call(logits_true, logits_false, labels2):
    # Single fused dispatch: pad the two logit vectors into the lane-dense
    # (2, P) layout, fold the batch sizes into an int32 constant, run kernel.
    p = labels2.shape[1]
    lt = jnp.asarray(logits_true, jnp.float32).reshape(-1)
    lf = jnp.asarray(logits_false, jnp.float32).reshape(-1)
    n_t = lt.shape[0]
    n_f = lf.shape[0]
    logits2 = jnp.stack(
        [jnp.pad(lt, (0, p - n_t)), jnp.pad(lf, (0, p - n_f))]
    )
    counts = jnp.array([n_t, n_f], dtype=jnp.int32)  # compile-time constant
    return _disc_loss(counts, logits2, labels2)


def _create_labels(key, n, r1, r2):
    # Deterministic stand-in for torch.empty(n, 1).uniform_(r1, r2); kept 1-D
    # (lane-dense) since only the values matter.
    return jax.random.uniform(key, (n,), dtype=jnp.float32, minval=r1, maxval=r2)


def _pad_row(v, p):
    v = jnp.asarray(v, dtype=jnp.float32).reshape(-1)
    return jnp.pad(v, (0, p - v.shape[0]))


class DiscriminatorLogitsLoss:
    def __init__(self, smoothing: float = 0.2, key=None):
        if key is None:
            key = jax.random.PRNGKey(42)
        self._key, k1, k2 = jax.random.split(key, 3)
        self.smoothing = smoothing
        self.labels_true = _create_labels(k1, 256, 1.0 - smoothing, 1.0)
        self.labels_false = _create_labels(k2, 256, 0.0, smoothing)
        self._labels2 = None
        self._rebuild_packed_labels()

    def _rebuild_packed_labels(self):
        # Padded, lane-dense (2, P) label slab; built once, kept resident on
        # device, only rebuilt on the rare buffer-growth branch.
        buf = max(self.labels_true.shape[0], self.labels_false.shape[0])
        p = int(pl.cdiv(max(buf, 256), 128)) * 128
        self._labels2 = jax.device_put(
            jnp.stack(
                [_pad_row(self.labels_true, p), _pad_row(self.labels_false, p)]
            )
        )

    def __call__(self, logits_true, logits_false):
        n_t = int(logits_true.shape[0])
        n_f = int(logits_false.shape[0])

        # Buffer growth path, mirroring the PyTorch module's re-registration.
        grew = False
        if n_t > self.labels_true.shape[0]:
            self._key, k = jax.random.split(self._key)
            self.labels_true = _create_labels(k, n_t, 1.0 - self.smoothing, 1.0)
            grew = True
        if n_f > self.labels_false.shape[0]:
            self._key, k = jax.random.split(self._key)
            self.labels_false = _create_labels(k, n_f, 0.0, self.smoothing)
            grew = True
        if grew:
            self._rebuild_packed_labels()

        return _disc_loss_call(logits_true, logits_false, self._labels2)


def _reference(logits_true, labels_true, logits_false, labels_false):
    def bce(x, y):
        x = x.reshape(-1)
        y = y.reshape(-1)
        return jnp.mean(
            jnp.maximum(x, 0.0) - x * y + jnp.log1p(jnp.exp(-jnp.abs(x)))
        )

    return bce(logits_true, labels_true), bce(logits_false, labels_false)


if __name__ == "__main__":
    key = jax.random.PRNGKey(0)
    k_true, k_false, k_mod = jax.random.split(key, 3)

    N = 8  # discriminator batch size
    logits_true = jax.random.normal(k_true, (N, 1), dtype=jnp.float32)
    logits_false = jax.random.normal(k_false, (N, 1), dtype=jnp.float32)

    loss_mod = DiscriminatorLogitsLoss(smoothing=0.2, key=k_mod)
    loss_t, loss_f = loss_mod(logits_true, logits_false)
    jax.block_until_ready((loss_t, loss_f))

    # Sanity check against pure-JAX reference.
    ref_t, ref_f = _reference(
        logits_true, loss_mod.labels_true[:N], logits_false, loss_mod.labels_false[:N]
    )
    assert jnp.allclose(loss_t, ref_t, atol=1e-5, rtol=1e-5), (loss_t, ref_t)
    assert jnp.allclose(loss_f, ref_f, atol=1e-5, rtol=1e-5), (loss_f, ref_f)

    # Second call: hits the cached jit + resident label slab (no label re-pad).
    loss_t2, loss_f2 = loss_mod(logits_true, logits_false)
    jax.block_until_ready((loss_t2, loss_f2))
    assert jnp.allclose(loss_t2, ref_t, atol=1e-5, rtol=1e-5)
    assert jnp.allclose(loss_f2, ref_f, atol=1e-5, rtol=1e-5)

    print("KERNEL_OK")
</pallas_src>

<mosaic_0001>
module attributes {stable_mosaic.version = 11 : i64} {
  func.func @_disc_loss_kernel(%arg0: memref<2xi32, #tpu.memory_space<smem>>, %arg1: memref<2x256xf32, #tpu.memory_space<vmem>>, %arg2: memref<2x256xf32, #tpu.memory_space<vmem>>, %arg3: memref<2x1xf32, #tpu.memory_space<vmem>>) attributes {dimension_semantics = [], scalar_prefetch = 0 : i64, scratch_operands = 0 : i64, tpu.core_type = #tpu.core_type<tc>} {
    %c0 = arith.constant 0 : index
    %c0_0 = arith.constant 0 : index
    %0 = vector.load %arg1[%c0, %c0_0] : memref<2x256xf32, #tpu.memory_space<vmem>>, vector<2x256xf32>
    %c0_1 = arith.constant 0 : index
    %c0_2 = arith.constant 0 : index
    %1 = vector.load %arg2[%c0_1, %c0_2] : memref<2x256xf32, #tpu.memory_space<vmem>>, vector<2x256xf32>
    %cst = arith.constant 0.000000e+00 : f32
    %2 = vector.broadcast %cst : f32 to vector<2x256xf32>
    %3 = arith.maximumf %0, %2 : vector<2x256xf32>
    %4 = arith.mulf %0, %1 : vector<2x256xf32>
    %5 = arith.subf %3, %4 : vector<2x256xf32>
    %6 = math.absf %0 : vector<2x256xf32>
    %cst_3 = arith.constant 0.000000e+00 : f32
    %7 = vector.broadcast %cst_3 : f32 to vector<2x256xf32>
    %8 = arith.subf %7, %6 : vector<2x256xf32>
    %9 = math.exp %8 : vector<2x256xf32>
    %10 = math.log1p %9 : vector<2x256xf32>
    %11 = arith.addf %5, %10 : vector<2x256xf32>
    %c0_4 = arith.constant 0 : index
    %12 = memref.load %arg0[%c0_4] : memref<2xi32, #tpu.memory_space<smem>>
    %c1 = arith.constant 1 : index
    %13 = memref.load %arg0[%c1] : memref<2xi32, #tpu.memory_space<smem>>
    %14 = tpu.iota {dimensions = array<i32: 1>} : vector<2x256xi32>
    %15 = tpu.iota {dimensions = array<i32: 0>} : vector<2x256xi32>
    %c0_i32 = arith.constant 0 : i32
    %16 = vector.broadcast %c0_i32 : i32 to vector<2x256xi32>
    %17 = arith.cmpi eq, %15, %16 : vector<2x256xi32>
    %18 = vector.broadcast %12 : i32 to vector<2x256xi32>
    %19 = vector.broadcast %13 : i32 to vector<2x256xi32>
    %20 = arith.select %17, %18, %19 : vector<2x256xi1>, vector<2x256xi32>
    %21 = arith.cmpi slt, %14, %20 : vector<2x256xi32>
    %cst_5 = arith.constant 0.000000e+00 : f32
    %22 = vector.broadcast %cst_5 : f32 to vector<2x256xf32>
    %23 = arith.select %21, %11, %22 : vector<2x256xi1>, vector<2x256xf32>
    %cst_6 = arith.constant dense<0.000000e+00> : vector<2xf32>
    %24 = vector.multi_reduction <add>, %23, %cst_6 [1] : vector<2x256xf32> to vector<2xf32>
    %25 = vector.shape_cast %24 : vector<2xf32> to vector<2x1xf32>
    %26 = tpu.iota {dimensions = array<i32: 0>} : vector<2x1xi32>
    %c0_i32_7 = arith.constant 0 : i32
    %27 = vector.broadcast %c0_i32_7 : i32 to vector<2x1xi32>
    %28 = arith.cmpi eq, %26, %27 : vector<2x1xi32>
    %29 = vector.broadcast %12 : i32 to vector<2x1xi32>
    %30 = vector.broadcast %13 : i32 to vector<2x1xi32>
    %31 = arith.select %28, %29, %30 : vector<2x1xi1>, vector<2x1xi32>
    %c1_i32 = arith.constant 1 : i32
    %32 = vector.broadcast %c1_i32 : i32 to vector<2x1xi32>
    %33 = arith.maxsi %31, %32 : vector<2x1xi32>
    %34 = arith.sitofp %33 : vector<2x1xi32> to vector<2x1xf32>
    %c0_i32_8 = arith.constant 0 : i32
    %35 = vector.broadcast %c0_i32_8 : i32 to vector<2x1xi32>
    %36 = arith.cmpi eq, %31, %35 : vector<2x1xi32>
    %37 = arith.divf %25, %34 : vector<2x1xf32>
    %cst_9 = arith.constant 0.000000e+00 : f32
    %38 = vector.broadcast %cst_9 : f32 to vector<2x1xf32>
    %39 = arith.select %36, %38, %37 : vector<2x1xi1>, vector<2x1xf32>
    %c0_10 = arith.constant 0 : index
    %c0_11 = arith.constant 0 : index
    %40 = vector.load %arg3[%c0_10, %c0_11] : memref<2x1xf32, #tpu.memory_space<vmem>>, vector<2x1xf32>
    tpu.vector_store %arg3[%c0_10, %c0_11], %39 {strides = array<i32>} : memref<2x1xf32, #tpu.memory_space<vmem>>, vector<2x1xf32>,
    return
  }
}

</mosaic_0001>

<llo_original>
// kernel: _disc_loss_call.1
$region0: #{_disc_loss_call.1}
  #allocation0 [shape = 'u32[]', space=smem, size = 0x4, offset = 0x4, fixed_abs, tag = 'smem constant byte address 0x4 - core index']
  #allocation1 [shape = 'u32[144,128]{1,0:T(1,128)}', space=vmem, size = 0x12000, scoped, tag = 'internal scratch']
  %s0 = inlined_call_operand.vmem [shape: s32[2], index: 0, kind: input, shape index: {}]
  %s1 = inlined_call_operand.vmem [shape: f32[2,256], index: 1, kind: input, shape index: {}]
  %s2 = inlined_call_operand.vmem [shape: f32[2,256], index: 2, kind: input, shape index: {}]
  %s3 = inlined_call_operand.vmem [shape: f32[2,1], index: 3, kind: output, shape index: {}]
  %s4 = sld [smem:[#allocation0]]
  $region26: #{_disc_loss_call.1} parent=0
    _
  %s6 = ssub.s32 1, %s4
  %s7 = scalar_select 0, %s6, %s4
  $region1: #{_disc_loss_call.1} parent=0
    #allocation2 [shape = 'u8[512]{0}', space=smem, size = 0x200, scoped, tag = 'input window, operand 0, single buffered']
    #allocation3 [shape = 's32[1]{0}', space=sflag, size = 0x4, scoped, tag = 'scoped memory for _disc_loss_call.1']
    %8 = vsyncpa [#allocation3], 0
    // Predicated region
    $region2: #{_disc_loss_call.1} parent=1 // pred_check
      _
    $region3: #{_disc_loss_call.1} parent=1 // pred_check_branch
      %10 = sbr.rel (0) target = $region5
    $region4: #{_disc_loss_call.1} parent=1 // pred_region
      %s12 = ssub.s32 16, 16
      %13 = vsyncadd [#allocation3], %s12
      %s15 = sshll.u32 %s0, 4
      %s16 = int_to_ptr.vmem [resolvable:$true] %s15
      %18 = dma.vmem_to_smem %s16, 16, [#allocation2], [#allocation3]
    $region5: #{_disc_loss_call.1} parent=1 // pred_fallthru
      _
    // Predicated region
    $region6: #{_disc_loss_call.1} parent=1 // pred_check
      _
    $region7: #{_disc_loss_call.1} parent=1 // pred_check_branch
      %20 = sbr.rel (0) target = $region9
    $region8: #{_disc_loss_call.1} parent=1 // pred_region
      _
    $region9: #{_disc_loss_call.1} parent=1 // pred_fallthru
      _
    // Predicated region
    $region10: #{_disc_loss_call.1} parent=1 // pred_check
      _
    $region11: #{_disc_loss_call.1} parent=1 // pred_check_branch
      %22 = sbr.rel (0) target = $region13
    $region12: #{_disc_loss_call.1} parent=1 // pred_region
      _
    $region13: #{_disc_loss_call.1} parent=1 // pred_fallthru
      _
    // Predicated region
    $region14: #{_disc_loss_call.1} parent=1 // pred_check
      _
    $region15: #{_disc_loss_call.1} parent=1 // pred_check_branch
      %24 = sbr.rel (0) target = $region17
    $region16: #{_disc_loss_call.1} parent=1 // pred_region
      %25 = dma.done [#allocation3], 16
    $region17: #{_disc_loss_call.1} parent=1 // pred_fallthru
      _
    %26 = sfence
    %v27 = vld [vmem:[%s1] sm:$0xf]
    %v28 = vld [vmem:[%s2] sm:$0xf]
    %v29 = vmax.f32 %v27, 0.0
    %v30 = vmul.f32 %v27, %v28
    %v31 = vsub.f32 %v29, %v30
    %v32 = vand.u32 2147483647, %v27
    %v33 = vsub.f32 0.0, %v32
    %v34 = vmul.f32 %v33, 1.442695
    %v35 = vpow.pop %v34
    %v36 = vadd.f32 %v35, 1.0
    %v37 = vlog2.pop %v36
    %v38 = vmul.f32 %v37, 0.6931472
    %v39 = vmul.f32 -0.5, %v35
    %v40 = vadd.f32 %v39, 1.0
    %v41 = vmul.f32 %v40, %v35
    %v42 = vand.u32 2147483647, %v35
    %vm43 = vcmp.lt.f32.partialorder %v42, 0.0004427343
    %v44 = vsel %vm43, %v41, %v38
    %v45 = vadd.f32 %v31, %v44
    %s46 = sld [smem:[#allocation2]]
    %s47 = sld [smem:[#allocation2 + $0x1]]
    %v48 = vlaneseq
    %v49 = vand.u32 %v48, 127
    %v50 = vadd.s32 %v49, 128
    %v51 = vlaneseq
    %v52 = vshrl.u32 %v51, 7
    %vm53 = vcmp.eq.s32.totalorder %v52, 0
    %v54 = vstv %s46
    %v55 = vstv %s47
    %v56 = vsel %vm53, %v54, %v55
    %vm57 = vcmp.lt.s32.totalorder %v49, %v56
    %vm58 = vcmp.lt.s32.totalorder %v50, %v56
    %v61 = vunpack.c.l.s4 1983009808
    %v62 = vunpack.c.0.s8 %v61
    %v63 = vlaneseq
    %v64 = vshrl.u32 %v63, 7
    %v65 = vsub.s32 %v62, %v64
    %v66 = vrot.slane %v45, %v65
    %v67 = vcombine.high %v66, %v66
    %v70 = vsel %vm57, %v66, 0.0
    %v71 = vsel %vm58, %v67, 0.0
    %vm72 = vcmask 1041408
    %v73 = vsel %vm72, %v70, 0.0
    %v74 = vsel %vm72, %v71, 0.0
    %v75 = vadd.f32 %v73, %v74
    %76 = vadd.xlane.f32.xlu0 %v75
    %v77 = vpop.xlane.xlu0 %76
    %vm78 = vcmp.gt.s32.totalorder %v56, 1
    %v79 = vsel %vm78, %v56, 1
    %v80 = vcvt.s32.f32 %v79
    %vm81 = vcmp.eq.s32.totalorder %v56, 0
    %v82 = vrcp.pop %v80
    %v83 = vmul.f32 %v77, %v82
    %v84 = vsel %vm81, 0.0, %v83
    %vm85 = vcmask 1024
    %86 = vst.msk [vmem:[%s3] sm:$0x3] %vm85, %v84
    // Predicated region
    $region18: #{_disc_loss_call.1} parent=1 // pred_check
      _
    $region19: #{_disc_loss_call.1} parent=1 // pred_check_branch
      %88 = sbr.rel (0) target = $region21
    $region20: #{_disc_loss_call.1} parent=1 // pred_region
      _
    $region21: #{_disc_loss_call.1} parent=1 // pred_fallthru
      _
    // Predicated region
    $region22: #{_disc_loss_call.1} parent=1 // pred_check
      _
    $region23: #{_disc_loss_call.1} parent=1 // pred_check_branch
      %90 = sbr.rel (0) target = $region25
    $region24: #{_disc_loss_call.1} parent=1 // pred_region
      _
    $region25: #{_disc_loss_call.1} parent=1 // pred_fallthru
      _
    %91 = vsyncpa [#allocation3], 1

</llo_original>
